<compile_context>
chip_gen: v6e
topology: v6e:2x2x1
jax: 0.10.0
libtpu: 0.0.40
codegen_flags: <defaults>
</compile_context>

<pallas_src>
import functools

import jax
import jax.numpy as jnp
from jax.experimental import pallas as pl
from jax.experimental.pallas import tpu as pltpu


def _round_up(x, m):
    return (x + m - 1) // m * m


def _lora_kernel(x_ref, a_ref, b_ref, o_ref, tmp_ref, *, alpha):
    # Compute the low-rank intermediate once per row tile (first N tile only).
    @pl.when(pl.program_id(1) == 0)
    def _():
        tmp_ref[...] = alpha * jnp.dot(
            x_ref[...], a_ref[...], preferred_element_type=jnp.float32)

    tmp = tmp_ref[...]
    if b_ref.dtype != jnp.float32:
        # Tiny (TM, rank) cast so the second matmul is a native low-precision MXU pass.
        tmp = tmp.astype(b_ref.dtype)

    # (TM, rank) @ (rank, TN) -> f32, cast to output dtype (lane-dense store).
    o_ref[...] = jnp.dot(
        tmp, b_ref[...], preferred_element_type=jnp.float32).astype(o_ref.dtype)


def lora_forward(x, lora_a, lora_b, alpha):
    """x: (..., input_dim); lora_a: (input_dim, rank); lora_b: (rank, output_dim)."""
    *lead, input_dim = x.shape
    rank, output_dim = lora_b.shape
    assert lora_a.shape == (input_dim, rank)

    M = 1
    for d in lead:
        M *= d
    x2d = x.reshape(M, input_dim)

    out_dtype = x.dtype
    in_it = jnp.dtype(x.dtype).itemsize
    w_it = jnp.dtype(lora_b.dtype).itemsize
    out_it = jnp.dtype(out_dtype).itemsize

    # Initial tile sizes: full padded output width, up to 512 rows.
    TM = min(512, _round_up(M, 8))
    TN = _round_up(output_dim, 128)

    budget = 24 << 20  # VMEM budget for pipelined tiles (safe on v7x 64 MiB VMEM).

    def footprint(tm, tn):
        return (2 * tm * input_dim * in_it       # x tile, double-buffered
                + 2 * tm * tn * out_it           # out tile, double-buffered
                + 2 * rank * tn * w_it           # B tile, double-buffered
                + 2 * input_dim * rank * w_it    # A, resident (double-buffered)
                + tm * max(rank, 128) * 4)       # f32 low-rank scratch (lane-padded)

    # Shrink the output tile first (x @ A is reused across N tiles), then rows.
    while footprint(TM, TN) > budget and TN > 128:
        TN = _round_up(TN // 2, 128)
    while footprint(TM, TN) > budget and TM > 8:
        TM = _round_up(max(TM // 2, 8), 8)

    M_pad = _round_up(M, TM)
    N_pad = _round_up(output_dim, TN)

    if M_pad != M:
        x2d = jnp.pad(x2d, ((0, M_pad - M), (0, 0)))
    b_mat = lora_b
    if N_pad != output_dim:
        b_mat = jnp.pad(lora_b, ((0, 0), (0, N_pad - output_dim)))

    vmem_limit = int(min(max(footprint(TM, TN) * 3 // 2 + (4 << 20), 32 << 20),
                         64 << 20))

    cost = pl.CostEstimate(
        flops=2 * M * rank * (input_dim + output_dim),
        transcendentals=0,
        bytes_accessed=(M * input_dim * in_it
                        + (input_dim * rank + rank * output_dim) * w_it
                        + M * output_dim * out_it),
    )

    grid = (M_pad // TM, N_pad // TN)

    out2d = pl.pallas_call(
        functools.partial(_lora_kernel, alpha=float(alpha)),
        out_shape=jax.ShapeDtypeStruct((M_pad, N_pad), out_dtype),
        grid=grid,
        in_specs=[
            pl.BlockSpec((TM, input_dim), lambda i, j: (i, 0)),    # x row tile
            pl.BlockSpec((input_dim, rank), lambda i, j: (0, 0)),  # A, resident
            pl.BlockSpec((rank, TN), lambda i, j: (0, j)),         # B column tile
        ],
        out_specs=pl.BlockSpec((TM, TN), lambda i, j: (i, j)),
        scratch_shapes=[pltpu.VMEM((TM, rank), jnp.float32)],      # low-rank carry
        compiler_params=pltpu.CompilerParams(
            dimension_semantics=("parallel", "arbitrary"),
            vmem_limit_bytes=vmem_limit,
        ),
        cost_estimate=cost,
    )(x2d, lora_a, b_mat)

    out2d = out2d[:M, :output_dim]
    return out2d.reshape(*lead, output_dim)


if __name__ == "__main__":
    # Deterministic synthetic parameters (no checkpoint load).
    batch, seq = 2, 8
    input_dim, output_dim, rank = 32, 32, 4
    alpha = 2.0

    key = jax.random.PRNGKey(0)
    kx, ka, kb = jax.random.split(key, 3)

    std_dev = 1.0 / jnp.sqrt(jnp.float32(rank))
    x = jax.random.normal(kx, (batch, seq, input_dim), dtype=jnp.float32)
    lora_a = jax.random.normal(ka, (input_dim, rank), dtype=jnp.float32) * std_dev
    lora_b = jax.random.normal(kb, (rank, output_dim), dtype=jnp.float32) * std_dev

    out = lora_forward(x, lora_a, lora_b, alpha)
    out = jax.block_until_ready(out)

    # Reference check in plain JAX.
    ref = alpha * (x.reshape(-1, input_dim) @ lora_a @ lora_b)
    ref = ref.reshape(batch, seq, output_dim)
    assert out.shape == (batch, seq, output_dim)
    assert jnp.allclose(out, ref, atol=1e-4, rtol=1e-4), (
        float(jnp.max(jnp.abs(out - ref))))

    print("KERNEL_OK")
</pallas_src>

<mosaic_0001>
module attributes {stable_mosaic.version = 11 : i64} {
  func.func @_lora_kernel(%arg0: i32, %arg1: i32, %arg2: memref<16x32xf32, #tpu.memory_space<vmem>>, %arg3: memref<32x4xf32, #tpu.memory_space<vmem>>, %arg4: memref<4x128xf32, #tpu.memory_space<vmem>>, %arg5: memref<16x128xf32, #tpu.memory_space<vmem>>, %arg6: memref<16x4xf32, #tpu.memory_space<vmem>>) attributes {dimension_semantics = [#tpu.dimension_semantics<parallel>, #tpu.dimension_semantics<arbitrary>], iteration_bounds = array<i64: 1, 1>, scalar_prefetch = 0 : i64, scratch_operands = 1 : i64, tpu.core_type = #tpu.core_type<tc>, window_params = [{transform_indices = @transform_0, window_bounds = array<i64: 16, 32>}, {pipeline_mode = #tpu.pipeline_mode<synchronous>, transform_indices = @transform_1, window_bounds = array<i64: 32, 4>}, {transform_indices = @transform_2, window_bounds = array<i64: 4, 128>}, {transform_indices = @transform_3, window_bounds = array<i64: 16, 128>}]} {
    %c0_i32 = arith.constant 0 : i32
    %0 = arith.cmpi eq, %arg1, %c0_i32 : i32
    %1 = arith.extui %0 : i1 to i32
    %c0_i32_0 = arith.constant 0 : i32
    %2 = arith.cmpi ne, %1, %c0_i32_0 : i32
    scf.if %2 {
      %c0_6 = arith.constant 0 : index
      %c0_7 = arith.constant 0 : index
      %7 = vector.load %arg2[%c0_6, %c0_7] : memref<16x32xf32, #tpu.memory_space<vmem>>, vector<16x32xf32>
      %c0_8 = arith.constant 0 : index
      %c0_9 = arith.constant 0 : index
      %8 = vector.load %arg3[%c0_8, %c0_9] : memref<32x4xf32, #tpu.memory_space<vmem>>, vector<32x4xf32>
      %cst_10 = arith.constant dense<0.000000e+00> : vector<16x4xf32>
      %9 = tpu.matmul %7, %8, %cst_10 {dimension_numbers = #tpu.dot_dimension_numbers<[1], [0], [0], [1], [0, 0, 1, 1], [], []>} : vector<16x32xf32>, vector<32x4xf32>, vector<16x4xf32> -> vector<16x4xf32>
      %cst_11 = arith.constant 2.000000e+00 : f32
      %10 = vector.broadcast %cst_11 : f32 to vector<16x4xf32>
      %11 = arith.mulf %10, %9 : vector<16x4xf32>
      %c0_12 = arith.constant 0 : index
      %c0_13 = arith.constant 0 : index
      %12 = vector.load %arg6[%c0_12, %c0_13] : memref<16x4xf32, #tpu.memory_space<vmem>>, vector<16x4xf32>
      tpu.vector_store %arg6[%c0_12, %c0_13], %11 {strides = array<i32>} : memref<16x4xf32, #tpu.memory_space<vmem>>, vector<16x4xf32>,
    } else {
    }
    %c0 = arith.constant 0 : index
    %c0_1 = arith.constant 0 : index
    %3 = vector.load %arg6[%c0, %c0_1] : memref<16x4xf32, #tpu.memory_space<vmem>>, vector<16x4xf32>
    %c0_2 = arith.constant 0 : index
    %c0_3 = arith.constant 0 : index
    %4 = vector.load %arg4[%c0_2, %c0_3] : memref<4x128xf32, #tpu.memory_space<vmem>>, vector<4x128xf32>
    %cst = arith.constant dense<0.000000e+00> : vector<16x128xf32>
    %5 = tpu.matmul %3, %4, %cst {dimension_numbers = #tpu.dot_dimension_numbers<[1], [0], [0], [1], [0, 0, 1, 1], [], []>} : vector<16x4xf32>, vector<4x128xf32>, vector<16x128xf32> -> vector<16x128xf32>
    %c0_4 = arith.constant 0 : index
    %c0_5 = arith.constant 0 : index
    %6 = vector.load %arg5[%c0_4, %c0_5] : memref<16x128xf32, #tpu.memory_space<vmem>>, vector<16x128xf32>
    tpu.vector_store %arg5[%c0_4, %c0_5], %5 {strides = array<i32>} : memref<16x128xf32, #tpu.memory_space<vmem>>, vector<16x128xf32>,
    return
  }
  func.func @transform_0(%arg0: i32, %arg1: i32) -> (i32, i32) {
    %c0_i32 = arith.constant 0 : i32
    %c0_i32_0 = arith.constant 0 : i32
    return %arg0, %c0_i32 : i32, i32
  }
  func.func @transform_1(%arg0: i32, %arg1: i32) -> (i32, i32) {
    %c0_i32 = arith.constant 0 : i32
    %c0_i32_0 = arith.constant 0 : i32
    %c0_i32_1 = arith.constant 0 : i32
    return %c0_i32, %c0_i32_0 : i32, i32
  }
  func.func @transform_2(%arg0: i32, %arg1: i32) -> (i32, i32) {
    %c0_i32 = arith.constant 0 : i32
    %c0_i32_0 = arith.constant 0 : i32
    return %c0_i32, %arg1 : i32, i32
  }
  func.func @transform_3(%arg0: i32, %arg1: i32) -> (i32, i32) {
    %c0_i32 = arith.constant 0 : i32
    return %arg0, %arg1 : i32, i32
  }
}

</mosaic_0001>

<llo_original>
// kernel: tpu_custom_call.1
$region0: #{tpu_custom_call.1}
  #allocation0 [shape = 'u32[]', space=smem, size = 0x4, offset = 0x4, fixed_abs, tag = 'smem constant byte address 0x4 - core index']
  #allocation1 [shape = 'u32[144,128]{1,0:T(1,128)}', space=vmem, size = 0x12000, scoped, tag = 'internal scratch']
  #allocation2 [shape = 'f32[16,4]{1,0:T(8,128)}', space=vmem, size = 0x2000, scoped, tag = 'scratch operand']
  %s0 = inlined_call_operand.vmem [shape: f32[16,32], index: 0, kind: input, shape index: {}]
  %s1 = inlined_call_operand.vmem [shape: f32[32,4], index: 1, kind: input, shape index: {}]
  %s2 = inlined_call_operand.vmem [shape: f32[4,128], index: 2, kind: input, shape index: {}]
  %s3 = inlined_call_operand.hbm [shape: f32[16,128], index: 3, kind: output, shape index: {}]
  %s4 = sld [smem:[#allocation0]]
  $region26: #{tpu_custom_call.1} parent=0
    _
  %s6 = ssub.s32 1, %s4
  %s7 = scalar_select 0, %s6, %s4
  $region1: #{tpu_custom_call.1} parent=0
    #allocation3 [shape = 'u8[8192]{0}', space=vmem, size = 0x2000, scoped, tag = 'output window, operand 0, single buffered']
    #allocation4 [shape = 's32[1]{0}', space=sflag, size = 0x4, scoped, tag = 'scoped memory for tpu_custom_call.1']
    %8 = vsyncpa [#allocation4], 0
    // Predicated region
    $region2: #{tpu_custom_call.1} parent=1 // pred_check
      _
    $region3: #{tpu_custom_call.1} parent=1 // pred_check_branch
      %10 = sbr.rel (0) target = $region5
    $region4: #{tpu_custom_call.1} parent=1 // pred_region
      _
    $region5: #{tpu_custom_call.1} parent=1 // pred_fallthru
      _
    // Predicated region
    $region6: #{tpu_custom_call.1} parent=1 // pred_check
      _
    $region7: #{tpu_custom_call.1} parent=1 // pred_check_branch
      %12 = sbr.rel (0) target = $region9
    $region8: #{tpu_custom_call.1} parent=1 // pred_region
      _
    $region9: #{tpu_custom_call.1} parent=1 // pred_fallthru
      _
    // Predicated region
    $region10: #{tpu_custom_call.1} parent=1 // pred_check
      _
    $region11: #{tpu_custom_call.1} parent=1 // pred_check_branch
      %14 = sbr.rel (0) target = $region13
    $region12: #{tpu_custom_call.1} parent=1 // pred_region
      _
    $region13: #{tpu_custom_call.1} parent=1 // pred_fallthru
      _
    %p15 = scmp.eq.s32.totalorder 0, 0
    // Predicated region
    $region14: #{tpu_custom_call.1} parent=1 // pred_check
      %p16 = pneg %p15
    $region15: #{tpu_custom_call.1} parent=1 // pred_check_branch
      %18 = sbr.rel (%p16) target = $region17
    $region16: #{tpu_custom_call.1} parent=1 // pred_region
      %v19 = vld [vmem:[%s0] sm:$0xff]
      %v20 = vld [vmem:[%s0 + $0x8] sm:$0xff]
      %v21 = vld [vmem:[%s1] sm:$0xff]
      %v22 = vld [vmem:[%s1 + $0x8] sm:$0xff]
      %v23 = vld [vmem:[%s1 + $0x10] sm:$0xff]
      %v24 = vld [vmem:[%s1 + $0x18] sm:$0xff]
      %vm25 = vcmask 261120
      %v27 = vsel %vm25, %v19, 0
      %v30 = vsel %vm25, %v20, 0
      %32 = vmatprep.subr.mxu0 0.0
      %33 = vmatpush1.msra.mxu0 0.0
      %34 = vmatprep.subr.mxu0 0.0
      %35 = vmatpush1.msra.mxu0 0.0
      %36 = vmatprep.subr.mxu0 0.0
      %37 = vmatpush1.msra.mxu0 0.0
      %38 = vmatprep.subr.mxu0 0.0
      %39 = vmatpush1.msra.mxu0 0.0
      %40 = vmatprep.subr.mxu0 0.0
      %41 = vmatpush1.msra.mxu0 0.0
      %42 = vmatprep.subr.mxu0 0.0
      %43 = vmatpush1.msra.mxu0 0.0
      %44 = vmatprep.subr.mxu0 0.0
      %45 = vmatpush1.msra.mxu0 0.0
      %46 = vmatprep.subr.mxu0 0.0
      %47 = vmatpush1.msra.mxu0 0.0
      %48 = vmatprep.subr.mxu0 0.0
      %49 = vmatpush1.msra.mxu0 0.0
      %50 = vmatprep.subr.mxu0 0.0
      %51 = vmatpush1.msra.mxu0 0.0
      %52 = vmatprep.subr.mxu0 0.0
      %53 = vmatpush1.msra.mxu0 0.0
      %54 = vmatprep.subr.mxu0 0.0
      %55 = vmatpush1.msra.mxu0 0.0
      %56 = vmatprep.subr.mxu0 0.0
      %57 = vmatpush1.msra.mxu0 %v24
      %58 = vmatprep.subr.mxu0 0.0
      %59 = vmatpush1.msra.mxu0 %v23
      %60 = vmatprep.subr.mxu0 0.0
      %61 = vmatpush1.msra.mxu0 %v22
      %62 = vmatprep.subr.mxu0 0.0
      %63 = vmatpush1.msra.mxu0 %v21
      %64 = vmatprep.subr.mxu0 0.0
      %65 = vmatpush2.msra.mxu0 0.0
      %66 = vmatprep.subr.mxu0 0.0
      %67 = vmatpush2.msra.mxu0 0.0
      %68 = vmatprep.subr.mxu0 0.0
      %69 = vmatpush2.msra.mxu0 0.0
      %70 = vmatprep.subr.mxu0 0.0
      %71 = vmatpush2.msra.mxu0 0.0
      %72 = vmatprep.subr.mxu0 0.0
      %73 = vmatpush2.msra.mxu0 0.0
      %74 = vmatprep.subr.mxu0 0.0
      %75 = vmatpush2.msra.mxu0 0.0
      %76 = vmatprep.subr.mxu0 0.0
      %77 = vmatpush2.msra.mxu0 0.0
      %78 = vmatprep.subr.mxu0 0.0
      %79 = vmatpush2.msra.mxu0 0.0
      %80 = vmatprep.subr.mxu0 0.0
      %81 = vmatpush2.msra.mxu0 0.0
      %82 = vmatprep.subr.mxu0 0.0
      %83 = vmatpush2.msra.mxu0 0.0
      %84 = vmatprep.subr.mxu0 0.0
      %85 = vmatpush2.msra.mxu0 0.0
      %86 = vmatprep.subr.mxu0 0.0
      %87 = vmatpush2.msra.mxu0 0.0
      %88 = vmatprep.subr.mxu0 0.0
      %89 = vmatpush2.msra.mxu0 0.0
      %90 = vmatprep.subr.mxu0 0.0
      %91 = vmatpush2.msra.mxu0 0.0
      %92 = vmatprep.subr.mxu0 0.0
      %93 = vmatpush2.msra.mxu0 0.0
      %94 = vmatprep.subr.mxu0 0.0
      %95 = vmatpush2.msra.mxu0 0.0
      %96 = vmatprep.mubr.f32.mxu0 0.0
      %97 = vmatmul.mubr.f32.gmra.mxu0 %v27
      %v98 = vpop.f32.mrf.mxu0
      %v99 = vadd.f32 0.0, %v98
      %v100 = vpop.f32.mrf.mxu0
      %101 = vmatprep.mubr.f32.mxu0 0.0
      %102 = vmatmul.mubr.f32.gmra.mxu0 %v30
      %v103 = vpop.f32.mrf.mxu0
      %v104 = vadd.f32 0.0, %v103
      %v105 = vpop.f32.mrf.mxu0
      %106 = vdwg.mxu0
      %v107 = vmul.f32 %v99, 2.0
      %v108 = vmul.f32 %v104, 2.0
      %vm109 = vcmask 31744
      %110 = vst.msk [vmem:[#allocation2] sm:$0xff] %vm109, %v107
      %111 = vst.msk [vmem:[#allocation2 + $0x8] sm:$0xff] %vm109, %v108
    $region17: #{tpu_custom_call.1} parent=1 // pred_fallthru
      _
    %v112 = vld [vmem:[#allocation2] sm:$0xff]
    %v113 = vld [vmem:[#allocation2 + $0x8] sm:$0xff]
    %v114 = vld [vmem:[%s2] sm:$0xf]
    %vm115 = vcmask 31744
    %v117 = vsel %vm115, %v112, 0
    %v120 = vsel %vm115, %v113, 0
    %vm122 = vcmask 1043456
    %v124 = vsel %vm122, %v114, 0
    %126 = vmatprep.subr.mxu0 0.0
    %127 = vmatpush1.msra.mxu0 0.0
    %128 = vmatprep.subr.mxu0 0.0
    %129 = vmatpush1.msra.mxu0 0.0
    %130 = vmatprep.subr.mxu0 0.0
    %131 = vmatpush1.msra.mxu0 0.0
    %132 = vmatprep.subr.mxu0 0.0
    %133 = vmatpush1.msra.mxu0 0.0
    %134 = vmatprep.subr.mxu0 0.0
    %135 = vmatpush1.msra.mxu0 0.0
    %136 = vmatprep.subr.mxu0 0.0
    %137 = vmatpush1.msra.mxu0 0.0
    %138 = vmatprep.subr.mxu0 0.0
    %139 = vmatpush1.msra.mxu0 0.0
    %140 = vmatprep.subr.mxu0 0.0
    %141 = vmatpush1.msra.mxu0 0.0
    %142 = vmatprep.subr.mxu0 0.0
    %143 = vmatpush1.msra.mxu0 0.0
    %144 = vmatprep.subr.mxu0 0.0
    %145 = vmatpush1.msra.mxu0 0.0
    %146 = vmatprep.subr.mxu0 0.0
    %147 = vmatpush1.msra.mxu0 0.0
    %148 = vmatprep.subr.mxu0 0.0
    %149 = vmatpush1.msra.mxu0 0.0
    %150 = vmatprep.subr.mxu0 0.0
    %151 = vmatpush1.msra.mxu0 0.0
    %152 = vmatprep.subr.mxu0 0.0
    %153 = vmatpush1.msra.mxu0 0.0
    %154 = vmatprep.subr.mxu0 0.0
    %155 = vmatpush1.msra.mxu0 0.0
    %156 = vmatprep.subr.mxu0 0.0
    %157 = vmatpush1.msra.mxu0 %v124
    %158 = vmatprep.subr.mxu0 0.0
    %159 = vmatpush2.msra.mxu0 0.0
    %160 = vmatprep.subr.mxu0 0.0
    %161 = vmatpush2.msra.mxu0 0.0
    %162 = vmatprep.subr.mxu0 0.0
    %163 = vmatpush2.msra.mxu0 0.0
    %164 = vmatprep.subr.mxu0 0.0
    %165 = vmatpush2.msra.mxu0 0.0
    %166 = vmatprep.subr.mxu0 0.0
    %167 = vmatpush2.msra.mxu0 0.0
    %168 = vmatprep.subr.mxu0 0.0
    %169 = vmatpush2.msra.mxu0 0.0
    %170 = vmatprep.subr.mxu0 0.0
    %171 = vmatpush2.msra.mxu0 0.0
    %172 = vmatprep.subr.mxu0 0.0
    %173 = vmatpush2.msra.mxu0 0.0
    %174 = vmatprep.subr.mxu0 0.0
    %175 = vmatpush2.msra.mxu0 0.0
    %176 = vmatprep.subr.mxu0 0.0
    %177 = vmatpush2.msra.mxu0 0.0
    %178 = vmatprep.subr.mxu0 0.0
    %179 = vmatpush2.msra.mxu0 0.0
    %180 = vmatprep.subr.mxu0 0.0
    %181 = vmatpush2.msra.mxu0 0.0
    %182 = vmatprep.subr.mxu0 0.0
    %183 = vmatpush2.msra.mxu0 0.0
    %184 = vmatprep.subr.mxu0 0.0
    %185 = vmatpush2.msra.mxu0 0.0
    %186 = vmatprep.subr.mxu0 0.0
    %187 = vmatpush2.msra.mxu0 0.0
    %188 = vmatprep.subr.mxu0 0.0
    %189 = vmatpush2.msra.mxu0 0.0
    %190 = vmatprep.mubr.f32.mxu0 0.0
    %191 = vmatmul.mubr.f32.gmra.mxu0 %v117
    %v192 = vpop.f32.mrf.mxu0
    %v193 = vadd.f32 0.0, %v192
    %v194 = vpop.f32.mrf.mxu0
    %195 = vmatprep.mubr.f32.mxu0 0.0
    %196 = vmatmul.mubr.f32.gmra.mxu0 %v120
    %v197 = vpop.f32.mrf.mxu0
    %v198 = vadd.f32 0.0, %v197
    %v199 = vpop.f32.mrf.mxu0
    %200 = vdwg.mxu0
    %201 = vst [vmem:[#allocation3] sm:$0xff] %v193
    %202 = vst [vmem:[#allocation3 + $0x8] sm:$0xff] %v198
    // Predicated region
    $region18: #{tpu_custom_call.1} parent=1 // pred_check
      _
    $region19: #{tpu_custom_call.1} parent=1 // pred_check_branch
      %204 = sbr.rel (0) target = $region21
    $region20: #{tpu_custom_call.1} parent=1 // pred_region
      %s206 = ssub.s32 256, 256
      %207 = vsyncadd [#allocation4], %s206
      %s208 = sshll.u32 [#allocation3], 4
      %s209 = int_to_ptr.vmem [resolvable:$true] %s208
      %214 = dma.vmem_to_hbm [thread:$0]  %s209, 256, %s3, [#allocation4], 128, 128, 8
    $region21: #{tpu_custom_call.1} parent=1 // pred_fallthru
      _
    // Predicated region
    $region22: #{tpu_custom_call.1} parent=1 // pred_check
      _
    $region23: #{tpu_custom_call.1} parent=1 // pred_check_branch
      %216 = sbr.rel (0) target = $region25
    $region24: #{tpu_custom_call.1} parent=1 // pred_region
      %217 = dma.done [#allocation4], 256
    $region25: #{tpu_custom_call.1} parent=1 // pred_fallthru
      _
    %218 = vsyncpa [#allocation4], 1

</llo_original>
